<compile_context>
chip_gen: v7x
topology: tpu7x:2x2x1
jax: 0.10.0
libtpu: 0.0.40
codegen_flags: <defaults>
</compile_context>

<pallas_src>
import functools

import jax
import jax.numpy as jnp
from jax.experimental import pallas as pl
from jax.experimental.pallas import tpu as pltpu


# ----------------------------------------------------------------------------
# Pallas kernel 1: fused MLP forward  y = relu(x @ W1 + b1) @ W2 + b2
#   x tile      : (TB, D_in)   bf16 (cast once in the wrapper)
#   W1, W2      : bf16, VMEM-resident across all batch tiles (constant index_map)
#   b1, b2      : f32
#   accumulation: f32 (preferred_element_type); output f32
# ----------------------------------------------------------------------------
def _mlp_fwd_kernel(x_ref, w1_ref, b1_ref, w2_ref, b2_ref, o_ref):
    h = jnp.dot(x_ref[...], w1_ref[...],
                preferred_element_type=jnp.float32) + b1_ref[...]
    h = jnp.maximum(h, 0.0)
    # Intentional: ReLU output is downcast to bf16 to feed the MXU; the second
    # matmul still accumulates in f32.  Not bit-identical to an all-f32
    # PyTorch Linear path (documented divergence).
    y = jnp.dot(h.astype(jnp.bfloat16), w2_ref[...],
                preferred_element_type=jnp.float32) + b2_ref[...]
    o_ref[...] = y.astype(o_ref.dtype)


def mlp_forward(x, w1_t, b1, w2_t, b2, *, batch_tile=256):
    """x: [B, D_in]; w1_t: [D_in, H]; b1: [1, H]; w2_t: [H, D_out]; b2: [1, D_out]."""
    B, D_in = x.shape
    H = w1_t.shape[1]
    D_out = w2_t.shape[1]
    out_dtype = x.dtype  # keep f32 output (PyTorch Linear parity)

    # Batch tile: fixed-size tiles; pad B up instead of collapsing to one
    # whole-batch tile (bounded VMEM on all generations, keeps pipelining).
    if B >= batch_tile:
        TB = batch_tile
    else:
        TB = max(8, ((B + 7) // 8) * 8)
    B_pad = pl.cdiv(B, TB) * TB

    # Cast the streamed operand and the weights to bf16 once in the wrapper:
    # halves x's HBM->VMEM DMA and keeps the in-kernel path pure MXU feed.
    x_bf = x.astype(jnp.bfloat16)
    if B_pad != B:
        x_bf = jnp.pad(x_bf, ((0, B_pad - B), (0, 0)))
    w1_bf = w1_t.astype(jnp.bfloat16)
    w2_bf = w2_t.astype(jnp.bfloat16)

    const2 = lambda i: (0, 0)  # weights / biases: same block every step -> resident
    out = pl.pallas_call(
        _mlp_fwd_kernel,
        out_shape=jax.ShapeDtypeStruct((B_pad, D_out), out_dtype),
        grid_spec=pl.GridSpec(
            grid=(B_pad // TB,),
            in_specs=[
                pl.BlockSpec((TB, D_in), lambda i: (i, 0)),   # x: pipelined over batch
                pl.BlockSpec((D_in, H), const2),              # W1: resident
                pl.BlockSpec((1, H), const2),                 # b1: resident
                pl.BlockSpec((H, D_out), const2),             # W2: resident
                pl.BlockSpec((1, D_out), const2),             # b2: resident
            ],
            out_specs=pl.BlockSpec((TB, D_out), lambda i: (i, 0)),
        ),
        compiler_params=pltpu.CompilerParams(
            dimension_semantics=("parallel",),                # independent batch tiles
            vmem_limit_bytes=32 * 1024 * 1024,                # safe on v5e/v6e/v7x
        ),
    )(x_bf, w1_bf, b1, w2_bf, b2)
    if B_pad != B:
        out = out[:B]
    return out


# ----------------------------------------------------------------------------
# Pallas kernel 2: bucket gradient sync math.
# Mirrors finish_gradient_synchronization(): after the (summed) all-reduce,
# the flat bucket buffer is divided by world_size.  On a single device the
# all_reduce(SUM) is the identity.  The kernel streams a pre-packed 2-D
# (rows, 512) buffer in 4 MiB blocks and aliases input to output, so the
# scale is 1 HBM read + 1 HBM write of the bucket.
# ----------------------------------------------------------------------------
# TODO(synk): multi-device path should fuse this 1/world_size scale into a ring
#             reduce-scatter/all-gather (pltpu.make_async_remote_copy + per-slot
#             DMA semaphores, get_barrier_semaphore + collective_id); on v7x,
#             stagger the two TensorCores' ring phases so they don't RDMA the
#             same ICI direction simultaneously.  Not exercised here.
_BUCKET_LANES = 512          # lane-dense output rows (fat unmasked vst)
_BUCKET_MAX_ROWS = 2048      # 2048 x 512 f32 = 4 MiB per grid step


def _bucket_scale_kernel(flat_ref, o_ref, *, inv_world_size):
    o_ref[...] = flat_ref[...] * inv_world_size


def bucket_sync_2d(flat2d, world_size, block_rows):
    """flat2d: pre-packed (padded_rows, _BUCKET_LANES) f32 buffer. In-place scale."""
    padded_rows, lanes = flat2d.shape
    kernel = functools.partial(_bucket_scale_kernel,
                               inv_world_size=1.0 / float(world_size))
    return pl.pallas_call(
        kernel,
        out_shape=jax.ShapeDtypeStruct(flat2d.shape, flat2d.dtype),
        grid_spec=pl.GridSpec(
            grid=(padded_rows // block_rows,),
            in_specs=[pl.BlockSpec((block_rows, lanes), lambda i: (i, 0))],
            out_specs=pl.BlockSpec((block_rows, lanes), lambda i: (i, 0)),
        ),
        input_output_aliases={0: 0},                          # donate the packed buffer
        compiler_params=pltpu.CompilerParams(
            dimension_semantics=("parallel",),
            vmem_limit_bytes=32 * 1024 * 1024,
        ),
    )(flat2d)


# ----------------------------------------------------------------------------
# DDPBucketed wrapper (JAX version).  Bucketing of parameters is plain Python
# glue, exactly as in the PyTorch __init__ (sort by byte size descending,
# greedy-pack into buckets of at most bucket_size_mb MB).  Bucket 2-D layouts
# (offsets, padded rows, block size) are precomputed once here so the sync
# path does a single pack -> aliased scale -> unpack per bucket.
# ----------------------------------------------------------------------------
class DDPBucketedPallas:
    def __init__(self, params, bucket_size_mb, world_size=1):
        self.params = params            # dict name -> array
        self.world_size = world_size
        self.bucket_bytes = int(bucket_size_mb * 1024 * 1024)

        named = sorted(params.items(),
                       key=lambda kv: kv[1].size * kv[1].dtype.itemsize,
                       reverse=True)
        buckets = []
        cur, cur_size = [], 0
        for name, p in named:
            size = p.size * p.dtype.itemsize
            if cur_size + size > self.bucket_bytes and cur:
                buckets.append(cur)
                cur, cur_size = [], 0
            cur.append(name)
            cur_size += size
        if cur:
            buckets.append(cur)

        # Precompute per-bucket 2-D layout: (names, sizes, n, padded_rows, block_rows).
        self.bucket_layouts = []
        for names in buckets:
            sizes = [params[n].size for n in names]
            n = sum(sizes)
            rows = pl.cdiv(n, _BUCKET_LANES)
            rows8 = ((rows + 7) // 8) * 8
            block_rows = min(_BUCKET_MAX_ROWS, rows8)
            padded_rows = pl.cdiv(rows8, block_rows) * block_rows
            self.bucket_layouts.append(dict(
                names=names, sizes=sizes, n=n,
                padded_rows=padded_rows, block_rows=block_rows))

    # TODO(synk): keep gradients stored directly in persistent padded flat
    #             bucket buffers (views per param) so even the pack/unpack
    #             below disappears; here grads arrive as a dict per call.
    def forward(self, x):
        p = self.params
        return mlp_forward(x, p["w1_t"], p["b1"], p["w2_t"], p["b2"])

    def finish_gradient_synchronization(self, grads):
        if self.world_size == 1:
            return grads  # matches PyTorch: early return, grads untouched
        synced = dict(grads)
        for layout in self.bucket_layouts:
            names, sizes = layout["names"], layout["sizes"]
            n, padded_rows = layout["n"], layout["padded_rows"]
            n_total = padded_rows * _BUCKET_LANES
            pieces = [grads[name].reshape(-1) for name in names]
            if n_total != n:  # single tail-pad piece only when actually needed
                pieces.append(jnp.zeros((n_total - n,), dtype=pieces[0].dtype))
            flat2d = jnp.concatenate(pieces).reshape(padded_rows, _BUCKET_LANES)
            flat2d = bucket_sync_2d(flat2d, self.world_size, layout["block_rows"])
            flat = flat2d.reshape(-1)
            off = 0
            for name, sz in zip(names, sizes):
                synced[name] = flat[off:off + sz].reshape(grads[name].shape)
                off += sz
        return synced


# ----------------------------------------------------------------------------
# Reference (plain JAX) for correctness check — mirrors the kernel's dtype
# strategy (bf16 MXU operands, f32 accumulation, f32 bias/ReLU/output).
# ----------------------------------------------------------------------------
def mlp_forward_ref(x, w1_t, b1, w2_t, b2):
    xb = x.astype(jnp.bfloat16)
    w1b = w1_t.astype(jnp.bfloat16)
    h = jnp.dot(xb, w1b, preferred_element_type=jnp.float32) + b1
    h = jnp.maximum(h, 0.0)
    w2b = w2_t.astype(jnp.bfloat16)
    y = jnp.dot(h.astype(jnp.bfloat16), w2b, preferred_element_type=jnp.float32) + b2
    return y.astype(x.dtype)


if __name__ == "__main__":
    key = jax.random.PRNGKey(0)
    k_x, k_w1, k_b1, k_w2, k_b2 = jax.random.split(key, 5)

    # 128/256-aligned dims keep the MXU fed and stores lane-dense; batch=1024
    # with TB=256 gives a 4-step grid (even count -> shards cleanly across the
    # 2 TensorCores on v7x with DMA/compute overlap on each).
    batch, d_in, hidden, d_out = 1024, 256, 256, 128

    # Deterministic init; PyTorch Linear weights are (out, in) -> transpose.
    w1 = jax.random.normal(k_w1, (hidden, d_in), jnp.float32) * 0.1
    b1 = jax.random.normal(k_b1, (hidden,), jnp.float32) * 0.1
    w2 = jax.random.normal(k_w2, (d_out, hidden), jnp.float32) * 0.1
    b2 = jax.random.normal(k_b2, (d_out,), jnp.float32) * 0.1

    params = {
        "w1_t": w1.T,                       # [d_in, hidden]
        "b1": b1.reshape(1, hidden),        # [1, hidden]
        "w2_t": w2.T,                       # [hidden, d_out]
        "b2": b2.reshape(1, d_out),         # [1, d_out]
    }

    x = jax.random.normal(k_x, (batch, d_in), jnp.float32)

    ddp = DDPBucketedPallas(params, bucket_size_mb=1.0, world_size=1)

    y = ddp.forward(x)
    y = jax.block_until_ready(y)

    y_ref = mlp_forward_ref(x, params["w1_t"], params["b1"],
                            params["w2_t"], params["b2"])
    assert y.shape == (batch, d_out)
    assert jnp.allclose(y, y_ref, atol=1e-2, rtol=1e-2)

    # Exercise an unaligned batch (pads to a multiple of the tile internally).
    x_odd = x[: batch - 40]
    y_odd = jax.block_until_ready(ddp.forward(x_odd))
    assert y_odd.shape == (batch - 40, d_out)
    assert jnp.allclose(y_odd, y_ref[: batch - 40], atol=1e-2, rtol=1e-2)

    # Exercise the bucket-sync kernel too (simulate world_size=2 averaging).
    fake_grads = {n: jnp.ones_like(p) for n, p in params.items()}
    ddp2 = DDPBucketedPallas(params, bucket_size_mb=1.0, world_size=2)
    synced = ddp2.finish_gradient_synchronization(fake_grads)
    synced = jax.block_until_ready(synced)
    assert all(jnp.allclose(synced[n], 0.5 * fake_grads[n]) for n in fake_grads)

    print("KERNEL_OK")
</pallas_src>

<mosaic_0001>
module attributes {stable_mosaic.version = 11 : i64} {
  func.func @_mlp_fwd_kernel(%arg0: i32, %arg1: memref<256x256xbf16, #tpu.memory_space<vmem>>, %arg2: memref<256x256xbf16, #tpu.memory_space<vmem>>, %arg3: memref<1x256xf32, #tpu.memory_space<vmem>>, %arg4: memref<256x128xbf16, #tpu.memory_space<vmem>>, %arg5: memref<1x128xf32, #tpu.memory_space<vmem>>, %arg6: memref<256x128xf32, #tpu.memory_space<vmem>>) attributes {dimension_semantics = [#tpu.dimension_semantics<parallel>], iteration_bounds = array<i64: 4>, scalar_prefetch = 0 : i64, scratch_operands = 0 : i64, tpu.core_type = #tpu.core_type<tc>, window_params = [{transform_indices = @transform_0, window_bounds = array<i64: 256, 256>}, {pipeline_mode = #tpu.pipeline_mode<synchronous>, transform_indices = @transform_1, window_bounds = array<i64: 256, 256>}, {pipeline_mode = #tpu.pipeline_mode<synchronous>, transform_indices = @transform_2, window_bounds = array<i64: 1, 256>}, {pipeline_mode = #tpu.pipeline_mode<synchronous>, transform_indices = @transform_3, window_bounds = array<i64: 256, 128>}, {pipeline_mode = #tpu.pipeline_mode<synchronous>, transform_indices = @transform_4, window_bounds = array<i64: 1, 128>}, {transform_indices = @transform_5, window_bounds = array<i64: 256, 128>}]} {
    %c0 = arith.constant 0 : index
    %c0_0 = arith.constant 0 : index
    %0 = vector.load %arg1[%c0, %c0_0] : memref<256x256xbf16, #tpu.memory_space<vmem>>, vector<256x256xbf16>
    %c0_1 = arith.constant 0 : index
    %c0_2 = arith.constant 0 : index
    %1 = vector.load %arg2[%c0_1, %c0_2] : memref<256x256xbf16, #tpu.memory_space<vmem>>, vector<256x256xbf16>
    %cst = arith.constant dense<0.000000e+00> : vector<256x256xf32>
    %2 = tpu.matmul %0, %1, %cst {dimension_numbers = #tpu.dot_dimension_numbers<[1], [0], [0], [1], [0, 0, 1, 1], [], []>} : vector<256x256xbf16>, vector<256x256xbf16>, vector<256x256xf32> -> vector<256x256xf32>
    %c0_3 = arith.constant 0 : index
    %c0_4 = arith.constant 0 : index
    %3 = vector.load %arg3[%c0_3, %c0_4] : memref<1x256xf32, #tpu.memory_space<vmem>>, vector<1x256xf32>
    %4 = vector.broadcast %3 : vector<1x256xf32> to vector<256x256xf32>
    %5 = arith.addf %2, %4 : vector<256x256xf32>
    %cst_5 = arith.constant 0.000000e+00 : f32
    %6 = vector.broadcast %cst_5 : f32 to vector<256x256xf32>
    %7 = arith.maximumf %5, %6 : vector<256x256xf32>
    %8 = arith.truncf %7 : vector<256x256xf32> to vector<256x256xbf16>
    %c0_6 = arith.constant 0 : index
    %c0_7 = arith.constant 0 : index
    %9 = vector.load %arg4[%c0_6, %c0_7] : memref<256x128xbf16, #tpu.memory_space<vmem>>, vector<256x128xbf16>
    %cst_8 = arith.constant dense<0.000000e+00> : vector<256x128xf32>
    %10 = tpu.matmul %8, %9, %cst_8 {dimension_numbers = #tpu.dot_dimension_numbers<[1], [0], [0], [1], [0, 0, 1, 1], [], []>} : vector<256x256xbf16>, vector<256x128xbf16>, vector<256x128xf32> -> vector<256x128xf32>
    %c0_9 = arith.constant 0 : index
    %c0_10 = arith.constant 0 : index
    %11 = vector.load %arg5[%c0_9, %c0_10] : memref<1x128xf32, #tpu.memory_space<vmem>>, vector<1x128xf32>
    %12 = vector.broadcast %11 : vector<1x128xf32> to vector<256x128xf32>
    %13 = arith.addf %10, %12 : vector<256x128xf32>
    %c0_11 = arith.constant 0 : index
    %c0_12 = arith.constant 0 : index
    %14 = vector.load %arg6[%c0_11, %c0_12] : memref<256x128xf32, #tpu.memory_space<vmem>>, vector<256x128xf32>
    tpu.vector_store %arg6[%c0_11, %c0_12], %13 {strides = array<i32>} : memref<256x128xf32, #tpu.memory_space<vmem>>, vector<256x128xf32>,
    return
  }
  func.func @transform_0(%arg0: i32) -> (i32, i32) {
    %c0_i32 = arith.constant 0 : i32
    %c0_i32_0 = arith.constant 0 : i32
    return %arg0, %c0_i32 : i32, i32
  }
  func.func @transform_1(%arg0: i32) -> (i32, i32) {
    %c0_i32 = arith.constant 0 : i32
    %c0_i32_0 = arith.constant 0 : i32
    %c0_i32_1 = arith.constant 0 : i32
    return %c0_i32, %c0_i32_0 : i32, i32
  }
  func.func @transform_2(%arg0: i32) -> (i32, i32) {
    %c0_i32 = arith.constant 0 : i32
    %c0_i32_0 = arith.constant 0 : i32
    %c0_i32_1 = arith.constant 0 : i32
    return %c0_i32, %c0_i32_0 : i32, i32
  }
  func.func @transform_3(%arg0: i32) -> (i32, i32) {
    %c0_i32 = arith.constant 0 : i32
    %c0_i32_0 = arith.constant 0 : i32
    %c0_i32_1 = arith.constant 0 : i32
    return %c0_i32, %c0_i32_0 : i32, i32
  }
  func.func @transform_4(%arg0: i32) -> (i32, i32) {
    %c0_i32 = arith.constant 0 : i32
    %c0_i32_0 = arith.constant 0 : i32
    %c0_i32_1 = arith.constant 0 : i32
    return %c0_i32, %c0_i32_0 : i32, i32
  }
  func.func @transform_5(%arg0: i32) -> (i32, i32) {
    %c0_i32 = arith.constant 0 : i32
    %c0_i32_0 = arith.constant 0 : i32
    return %arg0, %c0_i32 : i32, i32
  }
}

</mosaic_0001>

<llo_original>
// kernel: tpu_custom_call.1
$region0: #{tpu_custom_call.1}
  #allocation0 [shape = 'u32[]', space=smem, size = 0x4, offset = 0x4, fixed_abs, tag = 'smem constant byte address 0x4 - core index']
  #allocation1 [shape = 'u32[144,128]{1,0:T(1,128)}', space=vmem, size = 0x12000, scoped, tag = 'internal scratch']
  %s0 = inlined_call_operand.hbm [shape: bf16[1024,256], index: 0, kind: input, shape index: {}]
  %s1 = inlined_call_operand.hbm [shape: bf16[256,256], index: 1, kind: input, shape index: {}]
  %s2 = inlined_call_operand.vmem [shape: f32[1,256], index: 2, kind: input, shape index: {}]
  %s3 = inlined_call_operand.hbm [shape: bf16[256,128], index: 3, kind: input, shape index: {}]
  %s4 = inlined_call_operand.vmem [shape: f32[1,128], index: 4, kind: input, shape index: {}]
  %s5 = inlined_call_operand.hbm [shape: f32[1024,128], index: 5, kind: output, shape index: {}]
  %s6 = sld [smem:[#allocation0]]
  $region65: #{tpu_custom_call.1} parent=0
    _
  %s8 = ssub.s32 1, %s6
  %s9 = scalar_select 0, %s8, %s6
  $region1: #{tpu_custom_call.1} parent=0
    #allocation2 [shape = 'u8[262144]{0}', space=vmem, size = 0x40000, scoped, tag = 'input window, operand 0']
    #allocation3 [shape = 's32[2]{0}', space=sflag, size = 0x8, scoped, tag = 'scoped memory for tpu_custom_call.1']
    #allocation4 [shape = 's32[2]{0}', space=sflag, size = 0x8, scoped, tag = 'scoped memory for tpu_custom_call.1']
    #allocation5 [shape = 'u8[131072]{0}', space=vmem, size = 0x20000, scoped, tag = 'input window, operand 1, single buffered']
    #allocation6 [shape = 's32[1]{0}', space=sflag, size = 0x4, scoped, tag = 'scoped memory for tpu_custom_call.1']
    #allocation7 [shape = 'u8[65536]{0}', space=vmem, size = 0x10000, scoped, tag = 'input window, operand 3, single buffered']
    #allocation8 [shape = 'u8[262144]{0}', space=vmem, size = 0x40000, scoped, tag = 'output window, operand 0']
    %10 = vsyncpa [#allocation3], 0
    %s11 = scalar_lea.sflag [#allocation3], 1
    %12 = vsyncpa %s11, 0
    %13 = vsyncpa [#allocation6], 0
    %14 = vsyncpa [#allocation4], 0
    %s15 = scalar_lea.sflag [#allocation4], 1
    %16 = vsyncpa %s15, 0
    loop: start=0, step=1, limit=6
    $region2: #{tpu_custom_call.1} parent=1 // loop_pre_header
      _
    $region3: #{tpu_custom_call.1} parent=1 // loop_header
      %s18 = sphi 0, %s22
      %p19 = scmp.ge.s32.totalorder %s18, 6
      %s28 = sphi 0, %s30
      %s31 = sphi 0, %s28
      %s32 = sphi 0, %s31
      %s48 = sphi 0, %s32
      %s52 = sphi 0, %s52
      %s54 = sphi 0, %s52
      %s55 = sphi 0, %s54
      %s69 = sphi 0, %s55
      %s73 = sphi 0, %s73
      %s75 = sphi 0, %s73
      %s76 = sphi 0, %s75
      %s90 = sphi 0, %s76
      %s94 = sphi 0, %s94
      %s96 = sphi 0, %s94
      %s97 = sphi 0, %s96
      %s111 = sphi 0, %s97
      %s115 = sphi 0, %s115
      %s117 = sphi 0, %s115
      %s118 = sphi 0, %s117
      %s132 = sphi 0, %s118
      %s138 = sphi 0, %s140
      %s141 = sphi 0, %s138
      %s142 = sphi 0, %s141
      %s158 = sphi 0, %s142
    $region4: #{tpu_custom_call.1} parent=1 // loop_header_branch
      %21 = sbr.rel (%p19) target = $region8
    $region5: #{tpu_custom_call.1} parent=1 // loop_body
      %s23 = ssub.s32 %s18, 1
      %s24 = ssub.s32 %s18, 2
      %s25 = sadd.s32 %s18, 1
      %s26 = ssub.s32 %s18, %s25
      %p27 = scmp.eq.s32.totalorder %s26, 0
      %s29 = sadd.s32 %s28, 1
      %s30 = scalar_select %p27, %s28, %s29
      %p33 = pneg %p27
      %p34 = scmp.eq.s32.totalorder %s18, 3
      %p35 = por %p33, %p34
      %p36 = scmp.ne.s32.totalorder %s28, %s31
      %p37 = scmp.eq.s32.totalorder %s18, 0
      %p38 = por %p36, %p37
      %p39 = scmp.ne.s32.totalorder %s28, %s31
      %p40 = scmp.eq.s32.totalorder %s23, 3
      %p41 = por %p39, %p40
      %p42 = scmp.ne.s32.totalorder %s31, %s32
      %p43 = scmp.eq.s32.totalorder %s23, 0
      %p44 = por %p42, %p43
      %p45 = scmp.ne.s32.totalorder %s31, %s32
      %p46 = scmp.eq.s32.totalorder %s24, 3
      %p47 = por %p45, %p46
      %p49 = scmp.ne.s32.totalorder %s32, %s48
      %p50 = scmp.eq.s32.totalorder %s24, 0
      %p51 = por %p49, %p50
      %s53 = sadd.s32 %s52, 1
      %p56 = scmp.eq.s32.totalorder %s18, 3
      %p57 = scmp.ne.s32.totalorder %s52, %s54
      %p58 = scmp.eq.s32.totalorder %s18, 0
      %p59 = por %p57, %p58
      %p60 = scmp.ne.s32.totalorder %s52, %s54
      %p61 = scmp.eq.s32.totalorder %s23, 3
      %p62 = por %p60, %p61
      %p63 = scmp.ne.s32.totalorder %s54, %s55
      %p64 = scmp.eq.s32.totalorder %s23, 0
      %p65 = por %p63, %p64
      %p66 = scmp.ne.s32.totalorder %s54, %s55
      %p67 = scmp.eq.s32.totalorder %s24, 3
      %p68 = por %p66, %p67
      %p70 = scmp.ne.s32.totalorder %s55, %s69
      %p71 = scmp.eq.s32.totalorder %s24, 0
      %p72 = por %p70, %p71
      %s74 = sadd.s32 %s73, 1
      %p77 = scmp.eq.s32.totalorder %s18, 3
      %p78 = scmp.ne.s32.totalorder %s73, %s75
      %p79 = scmp.eq.s32.totalorder %s18, 0
      %p80 = por %p78, %p79
      %p81 = scmp.ne.s32.totalorder %s73, %s75
      %p82 = scmp.eq.s32.totalorder %s23, 3
      %p83 = por %p81, %p82
      %p84 = scmp.ne.s32.totalorder %s75, %s76
      %p85 = scmp.eq.s32.totalorder %s23, 0
      %p86 = por %p84, %p85
      %p87 = scmp.ne.s32.totalorder %s75, %s76
      %p88 = scmp.eq.s32.totalorder %s24, 3
      %p89 = por %p87, %p88
      %p91 = scmp.ne.s32.totalorder %s76, %s90
      %p92 = scmp.eq.s32.totalorder %s24, 0
      %p93 = por %p91, %p92
      %s95 = sadd.s32 %s94, 1
      %p98 = scmp.eq.s32.totalorder %s18, 3
      %p99 = scmp.ne.s32.totalorder %s94, %s96
      %p100 = scmp.eq.s32.totalorder %s18, 0
      %p101 = por %p99, %p100
      %p102 = scmp.ne.s32.totalorder %s94, %s96
      %p103 = scmp.eq.s32.totalorder %s23, 3
      %p104 = por %p102, %p103
      %p105 = scmp.ne.s32.totalorder %s96, %s97
      %p106 = scmp.eq.s32.totalorder %s23, 0
      %p107 = por %p105, %p106
      %p108 = scmp.ne.s32.totalorder %s96, %s97
      %p109 = scmp.eq.s32.totalorder %s24, 3
      %p110 = por %p108, %p109
      %p112 = scmp.ne.s32.totalorder %s97, %s111
      %p113 = scmp.eq.s32.totalorder %s24, 0
      %p114 = por %p112, %p113
      %s116 = sadd.s32 %s115, 1
      %p119 = scmp.eq.s32.totalorder %s18, 3
      %p120 = scmp.ne.s32.totalorder %s115, %s117
      %p121 = scmp.eq.s32.totalorder %s18, 0
      %p122 = por %p120, %p121
      %p123 = scmp.ne.s32.totalorder %s115, %s117
      %p124 = scmp.eq.s32.totalorder %s23, 3
      %p125 = por %p123, %p124
      %p126 = scmp.ne.s32.totalorder %s117, %s118
      %p127 = scmp.eq.s32.totalorder %s23, 0
      %p128 = por %p126, %p127
      %p129 = scmp.ne.s32.totalorder %s117, %s118
      %p130 = scmp.eq.s32.totalorder %s24, 3
      %p131 = por %p129, %p130
      %p133 = scmp.ne.s32.totalorder %s118, %s132
      %p134 = scmp.eq.s32.totalorder %s24, 0
      %p135 = por %p133, %p134
      %s136 = ssub.s32 %s18, %s25
      %p137 = scmp.eq.s32.totalorder %s136, 0
      %s139 = sadd.s32 %s138, 1
      %s140 = scalar_select %p137, %s138, %s139
      %p143 = pneg %p137
      %p144 = scmp.eq.s32.totalorder %s18, 3
      %p145 = por %p143, %p144
      %p146 = scmp.ne.s32.totalorder %s138, %s141
      %p147 = scmp.eq.s32.totalorder %s18, 0
      %p148 = por %p146, %p147
      %p149 = scmp.ne.s32.totalorder %s138, %s141
      %p150 = scmp.eq.s32.totalorder %s23, 3
      %p151 = por %p149, %p150
      %p152 = scmp.ne.s32.totalorder %s141, %s142
      %p153 = scmp.eq.s32.totalorder %s23, 0
      %p154 = por %p152, %p153
      %p155 = scmp.ne.s32.totalorder %s141, %s142
      %p156 = scmp.eq.s32.totalorder %s24, 3
      %p157 = por %p155, %p156
      %p159 = scmp.ne.s32.totalorder %s142, %s158
      %p160 = scmp.eq.s32.totalorder %s24, 0
      %p161 = por %p159, %p160
      %p162 = scmp.le.s32.totalorder 1, %s18
      %p163 = scmp.lt.s32.totalorder %s18, 5
      %p164 = pnand %p162, %p163
      %p165 = pneg %p164
      // Predicated region
      $region9: #{tpu_custom_call.1} parent=5 // pred_check
        _
      $region10: #{tpu_custom_call.1} parent=5 // pred_check_branch
        %167 = sbr.rel (%p164) target = $region12
      $region11: #{tpu_custom_call.1} parent=5 // pred_region
        %s168 = ssub.s32 %s18, 1
        // Predicated region
        $region13: #{tpu_custom_call.1} parent=11 // pred_check
          %p169 = pneg %p65
        $region14: #{tpu_custom_call.1} parent=11 // pred_check_branch
          %171 = sbr.rel (%p169) target = $region16
        $region15: #{tpu_custom_call.1} parent=11 // pred_region
          %s173 = ssub.s32 4096, 4096
          %174 = vsyncadd [#allocation6], %s173
          %s175 = sshll.u32 [#allocation5], 4
          %s176 = int_to_ptr.vmem [resolvable:$true] %s175
          %181 = dma.hbm_to_vmem [thread:$0]  %s1, 4096, %s176, [#allocation6], 128, 128, 8
        $region16: #{tpu_custom_call.1} parent=11 // pred_fallthru
          _
        // Predicated region
        $region17: #{tpu_custom_call.1} parent=11 // pred_check
          %p182 = pneg %p86
        $region18: #{tpu_custom_call.1} parent=11 // pred_check_branch
          %184 = sbr.rel (%p182) target = $region20
        $region19: #{tpu_custom_call.1} parent=11 // pred_region
          _
        $region20: #{tpu_custom_call.1} parent=11 // pred_fallthru
          _
        // Predicated region
        $region21: #{tpu_custom_call.1} parent=11 // pred_check
          %p185 = pneg %p107
        $region22: #{tpu_custom_call.1} parent=11 // pred_check_branch
          %187 = sbr.rel (%p185) target = $region24
        $region23: #{tpu_custom_call.1} parent=11 // pred_region
          %s189 = ssub.s32 2048, 2048
          %190 = vsyncadd [#allocation6], %s189
          %s191 = sshll.u32 [#allocation7], 4
          %s192 = int_to_ptr.vmem [resolvable:$true] %s191
          %197 = dma.hbm_to_vmem [thread:$0]  %s3, 2048, %s192, [#allocation6], 64, 64, 4
        $region24: #{tpu_custom_call.1} parent=11 // pred_fallthru
          _
        // Predicated region
        $region25: #{tpu_custom_call.1} parent=11 // pred_check
          %p198 = pneg %p128
        $region26: #{tpu_custom_call.1} parent=11 // pred_check_branch
          %200 = sbr.rel (%p198) target = $region28
        $region27: #{tpu_custom_call.1} parent=11 // pred_region
          _
        $region28: #{tpu_custom_call.1} parent=11 // pred_fallthru
          _
      $region12: #{tpu_custom_call.1} parent=5 // pred_fallthru
        _
      %p201 = scmp.lt.s32.totalorder %s18, 4
      // Predicated region
      $region29: #{tpu_custom_call.1} parent=5 // pred_check
        %p202 = pneg %p201
      $region30: #{tpu_custom_call.1} parent=5 // pred_check_branch
        %204 = sbr.rel (%p202) target = $region32
      $region31: #{tpu_custom_call.1} parent=5 // pred_region
        // Predicated region
        $region33: #{tpu_custom_call.1} parent=31 // pred_check
          %p205 = pneg %p38
        $region34: #{tpu_custom_call.1} parent=31 // pred_check_branch
          %207 = sbr.rel (%p205) target = $region36
        $region35: #{tpu_custom_call.1} parent=31 // pred_region
          %s208 = sand.u32 %s28, 1
          %s209 = scalar_lea.sflag [#allocation3], %s208
          %s210 = sand.u32 %s28, 1
          %s211 = smul.addr %s210, 256
          %s212 = scalar_lea.vmem [#allocation2], %s211
          %s213 = smul.u32 32, %s18
          %s215 = ssub.s32 4096, 4096
          %216 = vsyncadd %s209, %s215
          %s217 = smul.addr %s213, 2
          %s218 = smul.addr %s217, 64
          %s219 = scalar_lea.hbm %s0, %s218
          %s220 = sshll.u32 %s212, 4
          %s221 = int_to_ptr.vmem [resolvable:$true] %s220
          %226 = dma.hbm_to_vmem [thread:$0]  %s219, 4096, %s221, %s209, 128, 128, 8
        $region36: #{tpu_custom_call.1} parent=31 // pred_fallthru
          _
      $region32: #{tpu_custom_call.1} parent=5 // pred_fallthru
        _
      %p227 = scmp.le.s32.totalorder 1, %s18
      %p228 = scmp.lt.s32.totalorder %s18, 5
      %p229 = pnand %p227, %p228
      %p230 = pneg %p229
      // Predicated region
      $region37: #{tpu_custom_call.1} parent=5 // pred_check
        _
      $region38: #{tpu_custom_call.1} parent=5 // pred_check_branch
        %232 = sbr.rel (%p229) target = $region40
      $region39: #{tpu_custom_call.1} parent=5 // pred_region
        %s233 = ssub.s32 %s18, 1
        %s234 = sand.u32 %s31, 1
        %s235 = scalar_lea.sflag [#allocation3], %s234
        %s236 = sand.u32 %s31, 1
        %s237 = smul.addr %s236, 256
        %s238 = scalar_lea.vmem [#allocation2], %s237
        // Predicated region
        $region41: #{tpu_custom_call.1} parent=39 // pred_check
          %p239 = pneg %p44
        $region42: #{tpu_custom_call.1} parent=39 // pred_check_branch
          %241 = sbr.rel (%p239) target = $region44
        $region43: #{tpu_custom_call.1} parent=39 // pred_region
          %242 = dma.done %s235, 4096
        $region44: #{tpu_custom_call.1} parent=39 // pred_fallthru
          _
        // Predicated region
        $region45: #{tpu_custom_call.1} parent=39 // pred_check
          %p243 = pneg %p65
        $region46: #{tpu_custom_call.1} parent=39 // pred_check_branch
          %245 = sbr.rel (%p243) target = $region48
        $region47: #{tpu_custom_call.1} parent=39 // pred_region
          %246 = dma.done [#allocation6], 4096
        $region48: #{tpu_custom_call.1} parent=39 // pred_fallthru
          _
        // Predicated region
        $region49: #{tpu_custom_call.1} parent=39 // pred_check
          %p247 = pneg %p107
        $region50: #{tpu_custom_call.1} parent=39 // pred_check_branch
          %249 = sbr.rel (%p247) target = $region52
        $region51: #{tpu_custom_call.1} parent=39 // pred_region
          %250 = dma.done [#allocation6], 2048
        $region52: #{tpu_custom_call.1} parent=39 // pred_fallthru
          _
        %s251 = sand.u32 %s31, 1
        %s252 = scalar_lea.sflag [#allocation3], %s251
        %s253 = sand.u32 %s31, 1
        %s254 = smul.addr %s253, 256
        %s255 = scalar_lea.vmem [#allocation2], %s254
        %p256 = pneg %p44
        %p257 = pneg %p41
        %p258 = pneg %p65
        %p259 = pneg %p62
        %p260 = pneg %p86
        %p261 = pneg %p83
        %p262 = pneg %p107
        %p263 = pneg %p104
        %p264 = pneg %p128
        %p265 = pneg %p125
        %p266 = pneg %p154
        %p267 = pneg %p151
        %s268 = sand.u32 %s141, 1
        %s269 = scalar_lea.sflag [#allocation4], %s268
        %s270 = sand.u32 %s141, 1
        %s271 = smul.addr %s270, 256
        %s272 = scalar_lea.vmem [#allocation8], %s271
        %s273 = smul.u32 32, %s23
        %s274 = smul.u32 32, %s23
        %v276 = vld [vmem:[%s238] sm:$0xff]
        %v277 = vld [vmem:[%s238 + $0x8] sm:$0xff]
        %v278 = vld [vmem:[%s238 + $0x10] sm:$0xff]
        %v279 = vld [vmem:[%s238 + $0x18] sm:$0xff]
        %v280 = vld [vmem:[%s238 + $0x20] sm:$0xff]
        %v281 = vld [vmem:[%s238 + $0x28] sm:$0xff]
        %v282 = vld [vmem:[%s238 + $0x30] sm:$0xff]
        %v283 = vld [vmem:[%s238 + $0x38] sm:$0xff]
        %v284 = vld [vmem:[%s238 + $0x40] sm:$0xff]
        %v285 = vld [vmem:[%s238 + $0x48] sm:$0xff]
        %v286 = vld [vmem:[%s238 + $0x50] sm:$0xff]
        %v287 = vld [vmem:[%s238 + $0x58] sm:$0xff]
        %v288 = vld [vmem:[%s238 + $0x60] sm:$0xff]
        %v289 = vld [vmem:[%s238 + $0x68] sm:$0xff]
        %v290 = vld [vmem:[%s238 + $0x70] sm:$0xff]
        %v291 = vld [vmem:[%s238 + $0x78] sm:$0xff]
        %v292 = vld [vmem:[%s238 + $0x80] sm:$0xff]
        %v293 = vld [vmem:[%s238 + $0x88] sm:$0xff]
        %v294 = vld [vmem:[%s238 + $0x90] sm:$0xff]
        %v295 = vld [vmem:[%s238 + $0x98] sm:$0xff]
        %v296 = vld [vmem:[%s238 + $0xa0] sm:$0xff]
        %v297 = vld [vmem:[%s238 + $0xa8] sm:$0xff]
        %v298 = vld [vmem:[%s238 + $0xb0] sm:$0xff]
        %v299 = vld [vmem:[%s238 + $0xb8] sm:$0xff]
        %v300 = vld [vmem:[%s238 + $0xc0] sm:$0xff]
        %v301 = vld [vmem:[%s238 + $0xc8] sm:$0xff]
        %v302 = vld [vmem:[%s238 + $0xd0] sm:$0xff]
        %v303 = vld [vmem:[%s238 + $0xd8] sm:$0xff]
        %v304 = vld [vmem:[%s238 + $0xe0] sm:$0xff]
        %v305 = vld [vmem:[%s238 + $0xe8] sm:$0xff]
        %v306 = vld [vmem:[%s238 + $0xf0] sm:$0xff]
        %v307 = vld [vmem:[%s238 + $0xf8] sm:$0xff]
        %v308 = vld [vmem:[#allocation5] sm:$0xff]
        %v309 = vld [vmem:[#allocation5 + $0x8] sm:$0xff]
        %v310 = vld [vmem:[#allocation5 + $0x10] sm:$0xff]
        %v311 = vld [vmem:[#allocation5 + $0x18] sm:$0xff]
        %v312 = vld [vmem:[#allocation5 + $0x20] sm:$0xff]
        %v313 = vld [vmem:[#allocation5 + $0x28] sm:$0xff]
        %v314 = vld [vmem:[#allocation5 + $0x30] sm:$0xff]
        %v315 = vld [vmem:[#allocation5 + $0x38] sm:$0xff]
        %v316 = vld [vmem:[#allocation5 + $0x40] sm:$0xff]
        %v317 = vld [vmem:[#allocation5 + $0x48] sm:$0xff]
        %v318 = vld [vmem:[#allocation5 + $0x50] sm:$0xff]
        %v319 = vld [vmem:[#allocation5 + $0x58] sm:$0xff]
        %v320 = vld [vmem:[#allocation5 + $0x60] sm:$0xff]
        %v321 = vld [vmem:[#allocation5 + $0x68] sm:$0xff]
        %v322 = vld [vmem:[#allocation5 + $0x70] sm:$0xff]
        %v323 = vld [vmem:[#allocation5 + $0x78] sm:$0xff]
        %v324 = vld [vmem:[#allocation5 + $0x80] sm:$0xff]
        %v325 = vld [vmem:[#allocation5 + $0x88] sm:$0xff]
        %v326 = vld [vmem:[#allocation5 + $0x90] sm:$0xff]
        %v327 = vld [vmem:[#allocation5 + $0x98] sm:$0xff]
        %v328 = vld [vmem:[#allocation5 + $0xa0] sm:$0xff]
        %v329 = vld [vmem:[#allocation5 + $0xa8] sm:$0xff]
        %v330 = vld [vmem:[#allocation5 + $0xb0] sm:$0xff]
        %v331 = vld [vmem:[#allocation5 + $0xb8] sm:$0xff]
        %v332 = vld [vmem:[#allocation5 + $0xc0] sm:$0xff]
        %v333 = vld [vmem:[#allocation5 + $0xc8] sm:$0xff]
        %v334 = vld [vmem:[#allocation5 + $0xd0] sm:$0xff]
        %v335 = vld [vmem:[#allocation5 + $0xd8] sm:$0xff]
        %v336 = vld [vmem:[#allocation5 + $0xe0] sm:$0xff]
        %v337 = vld [vmem:[#allocation5 + $0xe8] sm:$0xff]
        %v338 = vld [vmem:[#allocation5 + $0xf0] sm:$0xff]
        %v339 = vld [vmem:[#allocation5 + $0xf8] sm:$0xff]
        %v340 = vld [vmem:[%s2] sm:$0x3]
        %v342 = vlaneseq
        %v343 = vshrl.u32 %v342, 7
        %v344 = vsub.s32 0, %v343
        %v345 = vrot.slane %v340, %v344
        %v346 = vlaneseq
        %v347 = vshrl.u32 %v346, 7
        %v348 = vsub.s32 1, %v347
        %v349 = vrot.slane %v340, %v348
        %v384 = vunpack.c.l.b16 %v276
        %v385 = vunpack.c.h.b16 %v276
        %v386 = vunpack.c.l.b16 %v277
        %v387 = vunpack.c.h.b16 %v277
        %v388 = vunpack.c.l.b16 %v278
        %v389 = vunpack.c.h.b16 %v278
        %v390 = vunpack.c.l.b16 %v279
        %v391 = vunpack.c.h.b16 %v279
        %v392 = vunpack.c.l.b16 %v280
        %v393 = vunpack.c.h.b16 %v280
        %v394 = vunpack.c.l.b16 %v281
        %v395 = vunpack.c.h.b16 %v281
        %v396 = vunpack.c.l.b16 %v282
        %v397 = vunpack.c.h.b16 %v282
        %v398 = vunpack.c.l.b16 %v283
        %v399 = vunpack.c.h.b16 %v283
        %v400 = vunpack.c.l.b16 %v284
        %v401 = vunpack.c.h.b16 %v284
        %v402 = vunpack.c.l.b16 %v285
        %v403 = vunpack.c.h.b16 %v285
        %v404 = vunpack.c.l.b16 %v286
        %v405 = vunpack.c.h.b16 %v286
        %v406 = vunpack.c.l.b16 %v287
        %v407 = vunpack.c.h.b16 %v287
        %v408 = vunpack.c.l.b16 %v288
        %v409 = vunpack.c.h.b16 %v288
        %v410 = vunpack.c.l.b16 %v289
        %v411 = vunpack.c.h.b16 %v289
        %v412 = vunpack.c.l.b16 %v290
        %v413 = vunpack.c.h.b16 %v290
        %v414 = vunpack.c.l.b16 %v291
        %v415 = vunpack.c.h.b16 %v291
        %v416 = vunpack.c.l.b16 %v292
        %v417 = vunpack.c.h.b16 %v292
        %v418 = vunpack.c.l.b16 %v293
        %v419 = vunpack.c.h.b16 %v293
        %v420 = vunpack.c.l.b16 %v294
        %v421 = vunpack.c.h.b16 %v294
        %v422 = vunpack.c.l.b16 %v295
        %v423 = vunpack.c.h.b16 %v295
        %v424 = vunpack.c.l.b16 %v296
        %v425 = vunpack.c.h.b16 %v296
        %v426 = vunpack.c.l.b16 %v297
        %v427 = vunpack.c.h.b16 %v297
        %v428 = vunpack.c.l.b16 %v298
        %v429 = vunpack.c.h.b16 %v298
        %v430 = vunpack.c.l.b16 %v299
        %v431 = vunpack.c.h.b16 %v299
        %v432 = vunpack.c.l.b16 %v300
        %v433 = vunpack.c.h.b16 %v300
        %v434 = vunpack.c.l.b16 %v301
        %v435 = vunpack.c.h.b16 %v301
        %v436 = vunpack.c.l.b16 %v302
        %v437 = vunpack.c.h.b16 %v302
        %v438 = vunpack.c.l.b16 %v303
        %v439 = vunpack.c.h.b16 %v303
        %v440 = vunpack.c.l.b16 %v304
        %v441 = vunpack.c.h.b16 %v304
        %v442 = vunpack.c.l.b16 %v305
        %v443 = vunpack.c.h.b16 %v305
        %v444 = vunpack.c.l.b16 %v306
        %v445 = vunpack.c.h.b16 %v306
        %v446 = vunpack.c.l.b16 %v307
        %v447 = vunpack.c.h.b16 %v307
        %v448 = vpack.c.b16 %v386, %v384
        %v449 = vpack.c.b16 %v387, %v385
        %v450 = vpack.c.b16 %v390, %v388
        %v451 = vpack.c.b16 %v391, %v389
        %v452 = vpack.c.b16 %v394, %v392
        %v453 = vpack.c.b16 %v395, %v393
        %v454 = vpack.c.b16 %v398, %v396
        %v455 = vpack.c.b16 %v399, %v397
        %v456 = vpack.c.b16 %v402, %v400
        %v457 = vpack.c.b16 %v403, %v401
        %v458 = vpack.c.b16 %v406, %v404
        %v459 = vpack.c.b16 %v407, %v405
        %v460 = vpack.c.b16 %v410, %v408
        %v461 = vpack.c.b16 %v411, %v409
        %v462 = vpack.c.b16 %v414, %v412
        %v463 = vpack.c.b16 %v415, %v413
        %v464 = vpack.c.b16 %v418, %v416
        %v465 = vpack.c.b16 %v419, %v417
        %v466 = vpack.c.b16 %v422, %v420
        %v467 = vpack.c.b16 %v423, %v421
        %v468 = vpack.c.b16 %v426, %v424
        %v469 = vpack.c.b16 %v427, %v425
        %v470 = vpack.c.b16 %v430, %v428
        %v471 = vpack.c.b16 %v431, %v429
        %v472 = vpack.c.b16 %v434, %v432
        %v473 = vpack.c.b16 %v435, %v433
        %v474 = vpack.c.b16 %v438, %v436
        %v475 = vpack.c.b16 %v439, %v437
        %v476 = vpack.c.b16 %v442, %v440
        %v477 = vpack.c.b16 %v443, %v441
        %v478 = vpack.c.b16 %v446, %v444
        %v479 = vpack.c.b16 %v447, %v445
        %v544 = vunpack.c.l.b16 %v308
        %v545 = vunpack.c.h.b16 %v308
        %v546 = vunpack.c.l.b16 %v309
        %v547 = vunpack.c.h.b16 %v309
        %v548 = vunpack.c.l.b16 %v310
        %v549 = vunpack.c.h.b16 %v310
        %v550 = vunpack.c.l.b16 %v311
        %v551 = vunpack.c.h.b16 %v311
        %v552 = vunpack.c.l.b16 %v312
        %v553 = vunpack.c.h.b16 %v312
        %v554 = vunpack.c.l.b16 %v313
        %v555 = vunpack.c.h.b16 %v313
        %v556 = vunpack.c.l.b16 %v314
        %v557 = vunpack.c.h.b16 %v314
        %v558 = vunpack.c.l.b16 %v315
        %v559 = vunpack.c.h.b16 %v315
        %v560 = vunpack.c.l.b16 %v316
        %v561 = vunpack.c.h.b16 %v316
        %v562 = vunpack.c.l.b16 %v317
        %v563 = vunpack.c.h.b16 %v317
        %v564 = vunpack.c.l.b16 %v318
        %v565 = vunpack.c.h.b16 %v318
        %v566 = vunpack.c.l.b16 %v319
        %v567 = vunpack.c.h.b16 %v319
        %v568 = vunpack.c.l.b16 %v320
        %v569 = vunpack.c.h.b16 %v320
        %v570 = vunpack.c.l.b16 %v321
        %v571 = vunpack.c.h.b16 %v321
        %v572 = vunpack.c.l.b16 %v322
        %v573 = vunpack.c.h.b16 %v322
        %v574 = vunpack.c.l.b16 %v323
        %v575 = vunpack.c.h.b16 %v323
        %v576 = vunpack.c.l.b16 %v324
        %v577 = vunpack.c.h.b16 %v324
        %v578 = vunpack.c.l.b16 %v325
        %v579 = vunpack.c.h.b16 %v325
        %v580 = vunpack.c.l.b16 %v326
        %v581 = vunpack.c.h.b16 %v326
        %v582 = vunpack.c.l.b16 %v327
        %v583 = vunpack.c.h.b16 %v327
        %v584 = vunpack.c.l.b16 %v328
        %v585 = vunpack.c.h.b16 %v328
        %v586 = vunpack.c.l.b16 %v329
        %v587 = vunpack.c.h.b16 %v329
        %v588 = vunpack.c.l.b16 %v330
        %v589 = vunpack.c.h.b16 %v330
        %v590 = vunpack.c.l.b16 %v331
        %v591 = vunpack.c.h.b16 %v331
        %v592 = vunpack.c.l.b16 %v332
        %v593 = vunpack.c.h.b16 %v332
        %v594 = vunpack.c.l.b16 %v333
        %v595 = vunpack.c.h.b16 %v333
        %v596 = vunpack.c.l.b16 %v334
        %v597 = vunpack.c.h.b16 %v334
        %v598 = vunpack.c.l.b16 %v335
        %v599 = vunpack.c.h.b16 %v335
        %v600 = vunpack.c.l.b16 %v336
        %v601 = vunpack.c.h.b16 %v336
        %v602 = vunpack.c.l.b16 %v337
        %v603 = vunpack.c.h.b16 %v337
        %v604 = vunpack.c.l.b16 %v338
        %v605 = vunpack.c.h.b16 %v338
        %v606 = vunpack.c.l.b16 %v339
        %v607 = vunpack.c.h.b16 %v339
        %v608 = vpack.c.b16 %v546, %v544
        %v609 = vpack.c.b16 %v547, %v545
        %v610 = vpack.c.b16 %v550, %v548
        %v611 = vpack.c.b16 %v551, %v549
        %v612 = vpack.c.b16 %v554, %v552
        %v613 = vpack.c.b16 %v555, %v553
        %v614 = vpack.c.b16 %v558, %v556
        %v615 = vpack.c.b16 %v559, %v557
        %v616 = vpack.c.b16 %v562, %v560
        %v617 = vpack.c.b16 %v563, %v561
        %v618 = vpack.c.b16 %v566, %v564
        %v619 = vpack.c.b16 %v567, %v565
        %v620 = vpack.c.b16 %v570, %v568
        %v621 = vpack.c.b16 %v571, %v569
        %v622 = vpack.c.b16 %v574, %v572
        %v623 = vpack.c.b16 %v575, %v573
        %v624 = vpack.c.b16 %v578, %v576
        %v625 = vpack.c.b16 %v579, %v577
        %v626 = vpack.c.b16 %v582, %v580
        %v627 = vpack.c.b16 %v583, %v581
        %v628 = vpack.c.b16 %v586, %v584
        %v629 = vpack.c.b16 %v587, %v585
        %v630 = vpack.c.b16 %v590, %v588
        %v631 = vpack.c.b16 %v591, %v589
        %v632 = vpack.c.b16 %v594, %v592
        %v633 = vpack.c.b16 %v595, %v593
        %v634 = vpack.c.b16 %v598, %v596
        %v635 = vpack.c.b16 %v599, %v597
        %v636 = vpack.c.b16 %v602, %v600
        %v637 = vpack.c.b16 %v603, %v601
        %v638 = vpack.c.b16 %v606, %v604
        %v639 = vpack.c.b16 %v607, %v605
        %672 = vmatprep.subr.bf16.mxu0 %v609
        %673 = vmatpush1.bf16.msra.mxu0 %v608
        %674 = vmatprep.subr.bf16.mxu0 %v611
        %675 = vmatpush1.bf16.msra.mxu0 %v610
        %676 = vmatprep.subr.bf16.mxu0 %v613
        %677 = vmatpush1.bf16.msra.mxu0 %v612
        %678 = vmatprep.subr.bf16.mxu0 %v615
        %679 = vmatpush1.bf16.msra.mxu0 %v614
        %680 = vmatprep.subr.bf16.mxu0 %v617
        %681 = vmatpush1.bf16.msra.mxu0 %v616
        %682 = vmatprep.subr.bf16.mxu0 %v619
        %683 = vmatpush1.bf16.msra.mxu0 %v618
        %684 = vmatprep.subr.bf16.mxu0 %v621
        %685 = vmatpush1.bf16.msra.mxu0 %v620
        %686 = vmatprep.subr.bf16.mxu0 %v623
        %687 = vmatpush1.bf16.msra.mxu0 %v622
        %688 = vmatprep.subr.bf16.mxu0 %v625
        %689 = vmatpush1.bf16.msra.mxu0 %v624
        %690 = vmatprep.subr.bf16.mxu0 %v627
        %691 = vmatpush1.bf16.msra.mxu0 %v626
        %692 = vmatprep.subr.bf16.mxu0 %v629
        %693 = vmatpush1.bf16.msra.mxu0 %v628
        %694 = vmatprep.subr.bf16.mxu0 %v631
        %695 = vmatpush1.bf16.msra.mxu0 %v630
        %696 = vmatprep.subr.bf16.mxu0 %v633
        %697 = vmatpush1.bf16.msra.mxu0 %v632
        %698 = vmatprep.subr.bf16.mxu0 %v635
        %699 = vmatpush1.bf16.msra.mxu0 %v634
        %700 = vmatprep.subr.bf16.mxu0 %v637
        %701 = vmatpush1.bf16.msra.mxu0 %v636
        %702 = vmatprep.subr.bf16.mxu0 %v639
        %703 = vmatpush1.bf16.msra.mxu0 %v638
        %704 = vmatprep.mubr.bf16.mxu0 %v449
        %705 = vmatmul.mubr.bf16.gmra.mrb[0].mxu0 %v448
        %v706 = vpop.f32.mrb[0].mxu0
        %v707 = vadd.f32 %v345, %v706
        %v708 = vpop.f32.mrb[0].mxu0
        %v709 = vadd.f32 %v349, %v708
        %v710 = vpop.f32.mrb[0].mxu0
        %v711 = vadd.f32 %v345, %v710
        %v712 = vpop.f32.mrb[0].mxu0
        %v713 = vadd.f32 %v349, %v712
        %714 = vmatprep.mubr.bf16.mxu0 %v451
        %715 = vmatmul.mubr.bf16.gmra.mrb[0].mxu0 %v450
        %v716 = vpop.f32.mrb[0].mxu0
        %v717 = vadd.f32 %v345, %v716
        %v718 = vpop.f32.mrb[0].mxu0
        %v719 = vadd.f32 %v349, %v718
        %v720 = vpop.f32.mrb[0].mxu0
        %v721 = vadd.f32 %v345, %v720
        %v722 = vpop.f32.mrb[0].mxu0
        %v723 = vadd.f32 %v349, %v722
        %724 = vmatprep.mubr.bf16.mxu0 %v453
        %725 = vmatmul.mubr.bf16.gmra.mrb[0].mxu0 %v452
        %v726 = vpop.f32.mrb[0].mxu0
        %v727 = vadd.f32 %v345, %v726
        %v728 = vpop.f32.mrb[0].mxu0
        %v729 = vadd.f32 %v349, %v728
        %v730 = vpop.f32.mrb[0].mxu0
        %v731 = vadd.f32 %v345, %v730
        %v732 = vpop.f32.mrb[0].mxu0
        %v733 = vadd.f32 %v349, %v732
        %734 = vmatprep.mubr.bf16.mxu0 %v455
        %735 = vmatmul.mubr.bf16.gmra.mrb[0].mxu0 %v454
        %v736 = vpop.f32.mrb[0].mxu0
        %v737 = vadd.f32 %v345, %v736
        %v738 = vpop.f32.mrb[0].mxu0
        %v739 = vadd.f32 %v349, %v738
        %v740 = vpop.f32.mrb[0].mxu0
        %v741 = vadd.f32 %v345, %v740
        %v742 = vpop.f32.mrb[0].mxu0
        %v743 = vadd.f32 %v349, %v742
        %744 = vmatprep.mubr.bf16.mxu0 %v457
        %745 = vmatmul.mubr.bf16.gmra.mrb[0].mxu0 %v456
        %v746 = vpop.f32.mrb[0].mxu0
        %v747 = vadd.f32 %v345, %v746
        %v748 = vpop.f32.mrb[0].mxu0
        %v749 = vadd.f32 %v349, %v748
        %v750 = vpop.f32.mrb[0].mxu0
        %v751 = vadd.f32 %v345, %v750
        %v752 = vpop.f32.mrb[0].mxu0
        %v753 = vadd.f32 %v349, %v752
        %754 = vmatprep.mubr.bf16.mxu0 %v459
        %755 = vmatmul.mubr.bf16.gmra.mrb[0].mxu0 %v458
        %v756 = vpop.f32.mrb[0].mxu0
        %v757 = vadd.f32 %v345, %v756
        %v758 = vpop.f32.mrb[0].mxu0
        %v759 = vadd.f32 %v349, %v758
        %v760 = vpop.f32.mrb[0].mxu0
        %v761 = vadd.f32 %v345, %v760
        %v762 = vpop.f32.mrb[0].mxu0
        %v763 = vadd.f32 %v349, %v762
        %764 = vmatprep.mubr.bf16.mxu0 %v461
        %765 = vmatmul.mubr.bf16.gmra.mrb[0].mxu0 %v460
        %v766 = vpop.f32.mrb[0].mxu0
        %v767 = vadd.f32 %v345, %v766
        %v768 = vpop.f32.mrb[0].mxu0
        %v769 = vadd.f32 %v349, %v768
        %v770 = vpop.f32.mrb[0].mxu0
        %v771 = vadd.f32 %v345, %v770
        %v772 = vpop.f32.mrb[0].mxu0
        %v773 = vadd.f32 %v349, %v772
        %774 = vmatprep.mubr.bf16.mxu0 %v463
        %775 = vmatmul.mubr.bf16.gmra.mrb[0].mxu0 %v462
        %v776 = vpop.f32.mrb[0].mxu0
        %v777 = vadd.f32 %v345, %v776
        %v778 = vpop.f32.mrb[0].mxu0
        %v779 = vadd.f32 %v349, %v778
        %v780 = vpop.f32.mrb[0].mxu0
        %v781 = vadd.f32 %v345, %v780
        %v782 = vpop.f32.mrb[0].mxu0
        %v783 = vadd.f32 %v349, %v782
        %784 = vmatprep.mubr.bf16.mxu0 %v465
        %785 = vmatmul.mubr.bf16.gmra.mrb[0].mxu0 %v464
        %v786 = vpop.f32.mrb[0].mxu0
        %v787 = vadd.f32 %v345, %v786
        %v788 = vpop.f32.mrb[0].mxu0
        %v789 = vadd.f32 %v349, %v788
        %v790 = vpop.f32.mrb[0].mxu0
        %v791 = vadd.f32 %v345, %v790
        %v792 = vpop.f32.mrb[0].mxu0
        %v793 = vadd.f32 %v349, %v792
        %794 = vmatprep.mubr.bf16.mxu0 %v467
        %795 = vmatmul.mubr.bf16.gmra.mrb[0].mxu0 %v466
        %v796 = vpop.f32.mrb[0].mxu0
        %v797 = vadd.f32 %v345, %v796
        %v798 = vpop.f32.mrb[0].mxu0
        %v799 = vadd.f32 %v349, %v798
        %v800 = vpop.f32.mrb[0].mxu0
        %v801 = vadd.f32 %v345, %v800
        %v802 = vpop.f32.mrb[0].mxu0
        %v803 = vadd.f32 %v349, %v802
        %804 = vmatprep.mubr.bf16.mxu0 %v469
        %805 = vmatmul.mubr.bf16.gmra.mrb[0].mxu0 %v468
        %v806 = vpop.f32.mrb[0].mxu0
        %v807 = vadd.f32 %v345, %v806
        %v808 = vpop.f32.mrb[0].mxu0
        %v809 = vadd.f32 %v349, %v808
        %v810 = vpop.f32.mrb[0].mxu0
        %v811 = vadd.f32 %v345, %v810
        %v812 = vpop.f32.mrb[0].mxu0
        %v813 = vadd.f32 %v349, %v812
        %814 = vmatprep.mubr.bf16.mxu0 %v471
        %815 = vmatmul.mubr.bf16.gmra.mrb[0].mxu0 %v470
        %v816 = vpop.f32.mrb[0].mxu0
        %v817 = vadd.f32 %v345, %v816
        %v818 = vpop.f32.mrb[0].mxu0
        %v819 = vadd.f32 %v349, %v818
        %v820 = vpop.f32.mrb[0].mxu0
        %v821 = vadd.f32 %v345, %v820
        %v822 = vpop.f32.mrb[0].mxu0
        %v823 = vadd.f32 %v349, %v822
        %824 = vmatprep.mubr.bf16.mxu0 %v473
        %825 = vmatmul.mubr.bf16.gmra.mrb[0].mxu0 %v472
        %v826 = vpop.f32.mrb[0].mxu0
        %v827 = vadd.f32 %v345, %v826
        %v828 = vpop.f32.mrb[0].mxu0
        %v829 = vadd.f32 %v349, %v828
        %v830 = vpop.f32.mrb[0].mxu0
        %v831 = vadd.f32 %v345, %v830
        %v832 = vpop.f32.mrb[0].mxu0
        %v833 = vadd.f32 %v349, %v832
        %834 = vmatprep.mubr.bf16.mxu0 %v475
        %835 = vmatmul.mubr.bf16.gmra.mrb[0].mxu0 %v474
        %v836 = vpop.f32.mrb[0].mxu0
        %v837 = vadd.f32 %v345, %v836
        %v838 = vpop.f32.mrb[0].mxu0
        %v839 = vadd.f32 %v349, %v838
        %v840 = vpop.f32.mrb[0].mxu0
        %v841 = vadd.f32 %v345, %v840
        %v842 = vpop.f32.mrb[0].mxu0
        %v843 = vadd.f32 %v349, %v842
        %844 = vmatprep.mubr.bf16.mxu0 %v477
        %845 = vmatmul.mubr.bf16.gmra.mrb[0].mxu0 %v476
        %v846 = vpop.f32.mrb[0].mxu0
        %v847 = vadd.f32 %v345, %v846
        %v848 = vpop.f32.mrb[0].mxu0
        %v849 = vadd.f32 %v349, %v848
        %v850 = vpop.f32.mrb[0].mxu0
        %v851 = vadd.f32 %v345, %v850
        %v852 = vpop.f32.mrb[0].mxu0
        %v853 = vadd.f32 %v349, %v852
        %854 = vmatprep.mubr.bf16.mxu0 %v479
        %855 = vmatmul.mubr.bf16.gmra.mrb[0].mxu0 %v478
        %v856 = vpop.f32.mrb[0].mxu0
        %v857 = vadd.f32 %v345, %v856
        %v858 = vpop.f32.mrb[0].mxu0
        %v859 = vadd.f32 %v349, %v858
        %v860 = vpop.f32.mrb[0].mxu0
        %v861 = vadd.f32 %v345, %v860
        %v862 = vpop.f32.mrb[0].mxu0
        %v863 = vadd.f32 %v349, %v862
        %864 = vdwg.mxu0
        %v865 = vmax.f32 %v707, 0.0
        %v866 = vmax.f32 %v709, 0.0
        %v867 = vmax.f32 %v711, 0.0
        %v868 = vmax.f32 %v713, 0.0
        %v869 = vmax.f32 %v717, 0.0
        %v870 = vmax.f32 %v719, 0.0
        %v871 = vmax.f32 %v721, 0.0
        %v872 = vmax.f32 %v723, 0.0
        %v873 = vmax.f32 %v727, 0.0
        %v874 = vmax.f32 %v729, 0.0
        %v875 = vmax.f32 %v731, 0.0
        %v876 = vmax.f32 %v733, 0.0
        %v877 = vmax.f32 %v737, 0.0
        %v878 = vmax.f32 %v739, 0.0
        %v879 = vmax.f32 %v741, 0.0
        %v880 = vmax.f32 %v743, 0.0
        %v881 = vmax.f32 %v747, 0.0
        %v882 = vmax.f32 %v749, 0.0
        %v883 = vmax.f32 %v751, 0.0
        %v884 = vmax.f32 %v753, 0.0
        %v885 = vmax.f32 %v757, 0.0
        %v886 = vmax.f32 %v759, 0.0
        %v887 = vmax.f32 %v761, 0.0
        %v888 = vmax.f32 %v763, 0.0
        %v889 = vmax.f32 %v767, 0.0
        %v890 = vmax.f32 %v769, 0.0
        %v891 = vmax.f32 %v771, 0.0
        %v892 = vmax.f32 %v773, 0.0
        %v893 = vmax.f32 %v777, 0.0
        %v894 = vmax.f32 %v779, 0.0
        %v895 = vmax.f32 %v781, 0.0
        %v896 = vmax.f32 %v783, 0.0
        %v897 = vmax.f32 %v787, 0.0
        %v898 = vmax.f32 %v789, 0.0
        %v899 = vmax.f32 %v791, 0.0
        %v900 = vmax.f32 %v793, 0.0
        %v901 = vmax.f32 %v797, 0.0
        %v902 = vmax.f32 %v799, 0.0
        %v903 = vmax.f32 %v801, 0.0
        %v904 = vmax.f32 %v803, 0.0
        %v905 = vmax.f32 %v807, 0.0
        %v906 = vmax.f32 %v809, 0.0
        %v907 = vmax.f32 %v811, 0.0
        %v908 = vmax.f32 %v813, 0.0
        %v909 = vmax.f32 %v817, 0.0
        %v910 = vmax.f32 %v819, 0.0
        %v911 = vmax.f32 %v821, 0.0
        %v912 = vmax.f32 %v823, 0.0
        %v913 = vmax.f32 %v827, 0.0
        %v914 = vmax.f32 %v829, 0.0
        %v915 = vmax.f32 %v831, 0.0
        %v916 = vmax.f32 %v833, 0.0
        %v917 = vmax.f32 %v837, 0.0
        %v918 = vmax.f32 %v839, 0.0
        %v919 = vmax.f32 %v841, 0.0
        %v920 = vmax.f32 %v843, 0.0
        %v921 = vmax.f32 %v847, 0.0
        %v922 = vmax.f32 %v849, 0.0
        %v923 = vmax.f32 %v851, 0.0
        %v924 = vmax.f32 %v853, 0.0
        %v925 = vmax.f32 %v857, 0.0
        %v926 = vmax.f32 %v859, 0.0
        %v927 = vmax.f32 %v861, 0.0
        %v928 = vmax.f32 %v863, 0.0
        %v929 = vpack.c.bf16 %v867, %v865
        %v930 = vpack.c.bf16 %v868, %v866
        %v931 = vpack.c.bf16 %v871, %v869
        %v932 = vpack.c.bf16 %v872, %v870
        %v933 = vpack.c.bf16 %v875, %v873
        %v934 = vpack.c.bf16 %v876, %v874
        %v935 = vpack.c.bf16 %v879, %v877
        %v936 = vpack.c.bf16 %v880, %v878
        %v937 = vpack.c.bf16 %v883, %v881
        %v938 = vpack.c.bf16 %v884, %v882
        %v939 = vpack.c.bf16 %v887, %v885
        %v940 = vpack.c.bf16 %v888, %v886
        %v941 = vpack.c.bf16 %v891, %v889
        %v942 = vpack.c.bf16 %v892, %v890
        %v943 = vpack.c.bf16 %v895, %v893
        %v944 = vpack.c.bf16 %v896, %v894
        %v945 = vpack.c.bf16 %v899, %v897
        %v946 = vpack.c.bf16 %v900, %v898
        %v947 = vpack.c.bf16 %v903, %v901
        %v948 = vpack.c.bf16 %v904, %v902
        %v949 = vpack.c.bf16 %v907, %v905
        %v950 = vpack.c.bf16 %v908, %v906
        %v951 = vpack.c.bf16 %v911, %v909
        %v952 = vpack.c.bf16 %v912, %v910
        %v953 = vpack.c.bf16 %v915, %v913
        %v954 = vpack.c.bf16 %v916, %v914
        %v955 = vpack.c.bf16 %v919, %v917
        %v956 = vpack.c.bf16 %v920, %v918
        %v957 = vpack.c.bf16 %v923, %v921
        %v958 = vpack.c.bf16 %v924, %v922
        %v959 = vpack.c.bf16 %v927, %v925
        %v960 = vpack.c.bf16 %v928, %v926
        %v961 = vld [vmem:[#allocation7] sm:$0xf]
        %v962 = vld [vmem:[#allocation7 + $0x4] sm:$0xf]
        %v963 = vld [vmem:[#allocation7 + $0x8] sm:$0xf]
        %v964 = vld [vmem:[#allocation7 + $0xc] sm:$0xf]
        %v965 = vld [vmem:[#allocation7 + $0x10] sm:$0xf]
        %v966 = vld [vmem:[#allocation7 + $0x14] sm:$0xf]
        %v967 = vld [vmem:[#allocation7 + $0x18] sm:$0xf]
        %v968 = vld [vmem:[#allocation7 + $0x1c] sm:$0xf]
        %v969 = vld [vmem:[#allocation7 + $0x20] sm:$0xf]
        %v970 = vld [vmem:[#allocation7 + $0x24] sm:$0xf]
        %v971 = vld [vmem:[#allocation7 + $0x28] sm:$0xf]
        %v972 = vld [vmem:[#allocation7 + $0x2c] sm:$0xf]
        %v973 = vld [vmem:[#allocation7 + $0x30] sm:$0xf]
        %v974 = vld [vmem:[#allocation7 + $0x34] sm:$0xf]
        %v975 = vld [vmem:[#allocation7 + $0x38] sm:$0xf]
        %v976 = vld [vmem:[#allocation7 + $0x3c] sm:$0xf]
        %v977 = vld [vmem:[#allocation7 + $0x40] sm:$0xf]
        %v978 = vld [vmem:[#allocation7 + $0x44] sm:$0xf]
        %v979 = vld [vmem:[#allocation7 + $0x48] sm:$0xf]
        %v980 = vld [vmem:[#allocation7 + $0x4c] sm:$0xf]
        %v981 = vld [vmem:[#allocation7 + $0x50] sm:$0xf]
        %v982 = vld [vmem:[#allocation7 + $0x54] sm:$0xf]
        %v983 = vld [vmem:[#allocation7 + $0x58] sm:$0xf]
        %v984 = vld [vmem:[#allocation7 + $0x5c] sm:$0xf]
        %v985 = vld [vmem:[#allocation7 + $0x60] sm:$0xf]
        %v986 = vld [vmem:[#allocation7 + $0x64] sm:$0xf]
        %v987 = vld [vmem:[#allocation7 + $0x68] sm:$0xf]
        %v988 = vld [vmem:[#allocation7 + $0x6c] sm:$0xf]
        %v989 = vld [vmem:[#allocation7 + $0x70] sm:$0xf]
        %v990 = vld [vmem:[#allocation7 + $0x74] sm:$0xf]
        %v991 = vld [vmem:[#allocation7 + $0x78] sm:$0xf]
        %v992 = vld [vmem:[#allocation7 + $0x7c] sm:$0xf]
        %v993 = vld [vmem:[%s4] sm:$0x1]
        %v995 = vlaneseq
        %v996 = vshrl.u32 %v995, 7
        %v997 = vsub.s32 0, %v996
        %v998 = vrot.slane %v993, %v997
        %v1032 = vunpack.c.l.b16 %v961
        %v1033 = vunpack.c.l.b16 %v962
        %v1034 = vunpack.c.l.b16 %v963
        %v1035 = vunpack.c.l.b16 %v964
        %v1036 = vunpack.c.l.b16 %v965
        %v1037 = vunpack.c.l.b16 %v966
        %v1038 = vunpack.c.l.b16 %v967
        %v1039 = vunpack.c.l.b16 %v968
        %v1040 = vunpack.c.l.b16 %v969
        %v1041 = vunpack.c.l.b16 %v970
        %v1042 = vunpack.c.l.b16 %v971
        %v1043 = vunpack.c.l.b16 %v972
        %v1044 = vunpack.c.l.b16 %v973
        %v1045 = vunpack.c.l.b16 %v974
        %v1046 = vunpack.c.l.b16 %v975
        %v1047 = vunpack.c.l.b16 %v976
        %v1048 = vunpack.c.l.b16 %v977
        %v1049 = vunpack.c.l.b16 %v978
        %v1050 = vunpack.c.l.b16 %v979
        %v1051 = vunpack.c.l.b16 %v980
        %v1052 = vunpack.c.l.b16 %v981
        %v1053 = vunpack.c.l.b16 %v982
        %v1054 = vunpack.c.l.b16 %v983
        %v1055 = vunpack.c.l.b16 %v984
        %v1056 = vunpack.c.l.b16 %v985
        %v1057 = vunpack.c.l.b16 %v986
        %v1058 = vunpack.c.l.b16 %v987
        %v1059 = vunpack.c.l.b16 %v988
        %v1060 = vunpack.c.l.b16 %v989
        %v1061 = vunpack.c.l.b16 %v990
        %v1062 = vunpack.c.l.b16 %v991
        %v1063 = vunpack.c.l.b16 %v992
        %v1064 = vpack.c.b16 %v1033, %v1032
        %v1065 = vpack.c.b16 %v1035, %v1034
        %v1066 = vpack.c.b16 %v1037, %v1036
        %v1067 = vpack.c.b16 %v1039, %v1038
        %v1068 = vpack.c.b16 %v1041, %v1040
        %v1069 = vpack.c.b16 %v1043, %v1042
        %v1070 = vpack.c.b16 %v1045, %v1044
        %v1071 = vpack.c.b16 %v1047, %v1046
        %v1072 = vpack.c.b16 %v1049, %v1048
        %v1073 = vpack.c.b16 %v1051, %v1050
        %v1074 = vpack.c.b16 %v1053, %v1052
        %v1075 = vpack.c.b16 %v1055, %v1054
        %v1076 = vpack.c.b16 %v1057, %v1056
        %v1077 = vpack.c.b16 %v1059, %v1058
        %v1078 = vpack.c.b16 %v1061, %v1060
        %v1079 = vpack.c.b16 %v1063, %v1062
        %1096 = vmatprep.subr.bf16.mxu0 0
        %1097 = vmatpush1.bf16.msra.mxu0 %v1064
        %1098 = vmatprep.subr.bf16.mxu0 0
        %1099 = vmatpush1.bf16.msra.mxu0 %v1065
        %1100 = vmatprep.subr.bf16.mxu0 0
        %1101 = vmatpush1.bf16.msra.mxu0 %v1066
        %1102 = vmatprep.subr.bf16.mxu0 0
        %1103 = vmatpush1.bf16.msra.mxu0 %v1067
        %1104 = vmatprep.subr.bf16.mxu0 0
        %1105 = vmatpush1.bf16.msra.mxu0 %v1068
        %1106 = vmatprep.subr.bf16.mxu0 0
        %1107 = vmatpush1.bf16.msra.mxu0 %v1069
        %1108 = vmatprep.subr.bf16.mxu0 0
        %1109 = vmatpush1.bf16.msra.mxu0 %v1070
        %1110 = vmatprep.subr.bf16.mxu0 0
        %1111 = vmatpush1.bf16.msra.mxu0 %v1071
        %1112 = vmatprep.subr.bf16.mxu0 0
        %1113 = vmatpush1.bf16.msra.mxu0 %v1072
        %1114 = vmatprep.subr.bf16.mxu0 0
        %1115 = vmatpush1.bf16.msra.mxu0 %v1073
        %1116 = vmatprep.subr.bf16.mxu0 0
        %1117 = vmatpush1.bf16.msra.mxu0 %v1074
        %1118 = vmatprep.subr.bf16.mxu0 0
        %1119 = vmatpush1.bf16.msra.mxu0 %v1075
        %1120 = vmatprep.subr.bf16.mxu0 0
        %1121 = vmatpush1.bf16.msra.mxu0 %v1076
        %1122 = vmatprep.subr.bf16.mxu0 0
        %1123 = vmatpush1.bf16.msra.mxu0 %v1077
        %1124 = vmatprep.subr.bf16.mxu0 0
        %1125 = vmatpush1.bf16.msra.mxu0 %v1078
        %1126 = vmatprep.subr.bf16.mxu0 0
        %1127 = vmatpush1.bf16.msra.mxu0 %v1079
        %1128 = vmatprep.mubr.bf16.mxu0 %v930
        %1129 = vmatmul.mubr.bf16.gmra.mrb[0].mxu0 %v929
        %v1130 = vpop.f32.mrb[0].mxu0
        %v1131 = vadd.f32 %v998, %v1130
        %v1132 = vpop.f32.mrb[0].mxu0
        %v1133 = vpop.f32.mrb[0].mxu0
        %v1134 = vadd.f32 %v998, %v1133
        %v1135 = vpop.f32.mrb[0].mxu0
        %1136 = vmatprep.mubr.bf16.mxu0 %v932
        %1137 = vmatmul.mubr.bf16.gmra.mrb[0].mxu0 %v931
        %v1138 = vpop.f32.mrb[0].mxu0
        %v1139 = vadd.f32 %v998, %v1138
        %v1140 = vpop.f32.mrb[0].mxu0
        %v1141 = vpop.f32.mrb[0].mxu0
        %v1142 = vadd.f32 %v998, %v1141
        %v1143 = vpop.f32.mrb[0].mxu0
        %1144 = vmatprep.mubr.bf16.mxu0 %v934
        %1145 = vmatmul.mubr.bf16.gmra.mrb[0].mxu0 %v933
        %v1146 = vpop.f32.mrb[0].mxu0
        %v1147 = vadd.f32 %v998, %v1146
        %v1148 = vpop.f32.mrb[0].mxu0
        %v1149 = vpop.f32.mrb[0].mxu0
        %v1150 = vadd.f32 %v998, %v1149
        %v1151 = vpop.f32.mrb[0].mxu0
        %1152 = vmatprep.mubr.bf16.mxu0 %v936
        %1153 = vmatmul.mubr.bf16.gmra.mrb[0].mxu0 %v935
        %v1154 = vpop.f32.mrb[0].mxu0
        %v1155 = vadd.f32 %v998, %v1154
        %v1156 = vpop.f32.mrb[0].mxu0
        %v1157 = vpop.f32.mrb[0].mxu0
        %v1158 = vadd.f32 %v998, %v1157
        %v1159 = vpop.f32.mrb[0].mxu0
        %1160 = vmatprep.mubr.bf16.mxu0 %v938
        %1161 = vmatmul.mubr.bf16.gmra.mrb[0].mxu0 %v937
        %v1162 = vpop.f32.mrb[0].mxu0
        %v1163 = vadd.f32 %v998, %v1162
        %v1164 = vpop.f32.mrb[0].mxu0
        %v1165 = vpop.f32.mrb[0].mxu0
        %v1166 = vadd.f32 %v998, %v1165
        %v1167 = vpop.f32.mrb[0].mxu0
        %1168 = vmatprep.mubr.bf16.mxu0 %v940
        %1169 = vmatmul.mubr.bf16.gmra.mrb[0].mxu0 %v939
        %v1170 = vpop.f32.mrb[0].mxu0
        %v1171 = vadd.f32 %v998, %v1170
        %v1172 = vpop.f32.mrb[0].mxu0
        %v1173 = vpop.f32.mrb[0].mxu0
        %v1174 = vadd.f32 %v998, %v1173
        %v1175 = vpop.f32.mrb[0].mxu0
        %1176 = vmatprep.mubr.bf16.mxu0 %v942
        %1177 = vmatmul.mubr.bf16.gmra.mrb[0].mxu0 %v941
        %v1178 = vpop.f32.mrb[0].mxu0
        %v1179 = vadd.f32 %v998, %v1178
        %v1180 = vpop.f32.mrb[0].mxu0
        %v1181 = vpop.f32.mrb[0].mxu0
        %v1182 = vadd.f32 %v998, %v1181
        %v1183 = vpop.f32.mrb[0].mxu0
        %1184 = vmatprep.mubr.bf16.mxu0 %v944
        %1185 = vmatmul.mubr.bf16.gmra.mrb[0].mxu0 %v943
        %v1186 = vpop.f32.mrb[0].mxu0
        %v1187 = vadd.f32 %v998, %v1186
        %v1188 = vpop.f32.mrb[0].mxu0
        %v1189 = vpop.f32.mrb[0].mxu0
        %v1190 = vadd.f32 %v998, %v1189
        %v1191 = vpop.f32.mrb[0].mxu0
        %1192 = vmatprep.mubr.bf16.mxu0 %v946
        %1193 = vmatmul.mubr.bf16.gmra.mrb[0].mxu0 %v945
        %v1194 = vpop.f32.mrb[0].mxu0
        %v1195 = vadd.f32 %v998, %v1194
        %v1196 = vpop.f32.mrb[0].mxu0
        %v1197 = vpop.f32.mrb[0].mxu0
        %v1198 = vadd.f32 %v998, %v1197
        %v1199 = vpop.f32.mrb[0].mxu0
        %1200 = vmatprep.mubr.bf16.mxu0 %v948
        %1201 = vmatmul.mubr.bf16.gmra.mrb[0].mxu0 %v947
        %v1202 = vpop.f32.mrb[0].mxu0
        %v1203 = vadd.f32 %v998, %v1202
        %v1204 = vpop.f32.mrb[0].mxu0
        %v1205 = vpop.f32.mrb[0].mxu0
        %v1206 = vadd.f32 %v998, %v1205
        %v1207 = vpop.f32.mrb[0].mxu0
        %1208 = vmatprep.mubr.bf16.mxu0 %v950
        %1209 = vmatmul.mubr.bf16.gmra.mrb[0].mxu0 %v949
        %v1210 = vpop.f32.mrb[0].mxu0
        %v1211 = vadd.f32 %v998, %v1210
        %v1212 = vpop.f32.mrb[0].mxu0
        %v1213 = vpop.f32.mrb[0].mxu0
        %v1214 = vadd.f32 %v998, %v1213
        %v1215 = vpop.f32.mrb[0].mxu0
        %1216 = vmatprep.mubr.bf16.mxu0 %v952
        %1217 = vmatmul.mubr.bf16.gmra.mrb[0].mxu0 %v951
        %v1218 = vpop.f32.mrb[0].mxu0
        %v1219 = vadd.f32 %v998, %v1218
        %v1220 = vpop.f32.mrb[0].mxu0
        %v1221 = vpop.f32.mrb[0].mxu0
        %v1222 = vadd.f32 %v998, %v1221
        %v1223 = vpop.f32.mrb[0].mxu0
        %1224 = vmatprep.mubr.bf16.mxu0 %v954
        %1225 = vmatmul.mubr.bf16.gmra.mrb[0].mxu0 %v953
        %v1226 = vpop.f32.mrb[0].mxu0
        %v1227 = vadd.f32 %v998, %v1226
        %v1228 = vpop.f32.mrb[0].mxu0
        %v1229 = vpop.f32.mrb[0].mxu0
        %v1230 = vadd.f32 %v998, %v1229
        %v1231 = vpop.f32.mrb[0].mxu0
        %1232 = vmatprep.mubr.bf16.mxu0 %v956
        %1233 = vmatmul.mubr.bf16.gmra.mrb[0].mxu0 %v955
        %v1234 = vpop.f32.mrb[0].mxu0
        %v1235 = vadd.f32 %v998, %v1234
        %v1236 = vpop.f32.mrb[0].mxu0
        %v1237 = vpop.f32.mrb[0].mxu0
        %v1238 = vadd.f32 %v998, %v1237
        %v1239 = vpop.f32.mrb[0].mxu0
        %1240 = vmatprep.mubr.bf16.mxu0 %v958
        %1241 = vmatmul.mubr.bf16.gmra.mrb[0].mxu0 %v957
        %v1242 = vpop.f32.mrb[0].mxu0
        %v1243 = vadd.f32 %v998, %v1242
        %v1244 = vpop.f32.mrb[0].mxu0
        %v1245 = vpop.f32.mrb[0].mxu0
        %v1246 = vadd.f32 %v998, %v1245
        %v1247 = vpop.f32.mrb[0].mxu0
        %1248 = vmatprep.mubr.bf16.mxu0 %v960
        %1249 = vmatmul.mubr.bf16.gmra.mrb[0].mxu0 %v959
        %v1250 = vpop.f32.mrb[0].mxu0
        %v1251 = vadd.f32 %v998, %v1250
        %v1252 = vpop.f32.mrb[0].mxu0
        %v1253 = vpop.f32.mrb[0].mxu0
        %v1254 = vadd.f32 %v998, %v1253
        %v1255 = vpop.f32.mrb[0].mxu0
        %1256 = vdwg.mxu0
        %1257 = vst [vmem:[%s272] sm:$0xff] %v1131
        %1258 = vst [vmem:[%s272 + $0x8] sm:$0xff] %v1134
        %1259 = vst [vmem:[%s272 + $0x10] sm:$0xff] %v1139
        %1260 = vst [vmem:[%s272 + $0x18] sm:$0xff] %v1142
        %1261 = vst [vmem:[%s272 + $0x20] sm:$0xff] %v1147
        %1262 = vst [vmem:[%s272 + $0x28] sm:$0xff] %v1150
        %1263 = vst [vmem:[%s272 + $0x30] sm:$0xff] %v1155
        %1264 = vst [vmem:[%s272 + $0x38] sm:$0xff] %v1158
        %1265 = vst [vmem:[%s272 + $0x40] sm:$0xff] %v1163
        %1266 = vst [vmem:[%s272 + $0x48] sm:$0xff] %v1166
        %1267 = vst [vmem:[%s272 + $0x50] sm:$0xff] %v1171
        %1268 = vst [vmem:[%s272 + $0x58] sm:$0xff] %v1174
        %1269 = vst [vmem:[%s272 + $0x60] sm:$0xff] %v1179
        %1270 = vst [vmem:[%s272 + $0x68] sm:$0xff] %v1182
        %1271 = vst [vmem:[%s272 + $0x70] sm:$0xff] %v1187
        %1272 = vst [vmem:[%s272 + $0x78] sm:$0xff] %v1190
        %1273 = vst [vmem:[%s272 + $0x80] sm:$0xff] %v1195
        %1274 = vst [vmem:[%s272 + $0x88] sm:$0xff] %v1198
        %1275 = vst [vmem:[%s272 + $0x90] sm:$0xff] %v1203
        %1276 = vst [vmem:[%s272 + $0x98] sm:$0xff] %v1206
        %1277 = vst [vmem:[%s272 + $0xa0] sm:$0xff] %v1211
        %1278 = vst [vmem:[%s272 + $0xa8] sm:$0xff] %v1214
        %1279 = vst [vmem:[%s272 + $0xb0] sm:$0xff] %v1219
        %1280 = vst [vmem:[%s272 + $0xb8] sm:$0xff] %v1222
        %1281 = vst [vmem:[%s272 + $0xc0] sm:$0xff] %v1227
        %1282 = vst [vmem:[%s272 + $0xc8] sm:$0xff] %v1230
        %1283 = vst [vmem:[%s272 + $0xd0] sm:$0xff] %v1235
        %1284 = vst [vmem:[%s272 + $0xd8] sm:$0xff] %v1238
        %1285 = vst [vmem:[%s272 + $0xe0] sm:$0xff] %v1243
        %1286 = vst [vmem:[%s272 + $0xe8] sm:$0xff] %v1246
        %1287 = vst [vmem:[%s272 + $0xf0] sm:$0xff] %v1251
        %1288 = vst [vmem:[%s272 + $0xf8] sm:$0xff] %v1254
        %s1289 = sand.u32 %s141, 1
        %s1290 = scalar_lea.sflag [#allocation4], %s1289
        %s1291 = sand.u32 %s141, 1
        %s1292 = smul.addr %s1291, 256
        %s1293 = scalar_lea.vmem [#allocation8], %s1292
        // Predicated region
        $region53: #{tpu_custom_call.1} parent=39 // pred_check
          %p1294 = pneg %p151
        $region54: #{tpu_custom_call.1} parent=39 // pred_check_branch
          %1296 = sbr.rel (%p1294) target = $region56
        $region55: #{tpu_custom_call.1} parent=39 // pred_region
          %s1297 = smul.u32 32, %s23
          %s1299 = ssub.s32 4096, 4096
          %1300 = vsyncadd %s1290, %s1299
          %s1301 = smul.addr %s1297, 128
          %s1302 = scalar_lea.hbm %s5, %s1301
          %s1303 = sshll.u32 %s1293, 4
          %s1304 = int_to_ptr.vmem [resolvable:$true] %s1303
          %1309 = dma.vmem_to_hbm [thread:$0]  %s1304, 4096, %s1302, %s1290, 128, 128, 8
        $region56: #{tpu_custom_call.1} parent=39 // pred_fallthru
          _
      $region40: #{tpu_custom_call.1} parent=5 // pred_fallthru
        _
      %p1310 = scmp.le.s32.totalorder 2, %s18
      // Predicated region
      $region57: #{tpu_custom_call.1} parent=5 // pred_check
        %p1311 = pneg %p1310
      $region58: #{tpu_custom_call.1} parent=5 // pred_check_branch
        %1313 = sbr.rel (%p1311) target = $region60
      $region59: #{tpu_custom_call.1} parent=5 // pred_region
        %s1314 = ssub.s32 %s18, 2
        // Predicated region
        $region61: #{tpu_custom_call.1} parent=59 // pred_check
          %p1315 = pneg %p157
        $region62: #{tpu_custom_call.1} parent=59 // pred_check_branch
          %1317 = sbr.rel (%p1315) target = $region64
        $region63: #{tpu_custom_call.1} parent=59 // pred_region
          %s1318 = sand.u32 %s142, 1
          %s1319 = scalar_lea.sflag [#allocation4], %s1318
          %s1320 = sand.u32 %s142, 1
          %s1321 = smul.addr %s1320, 256
          %s1322 = scalar_lea.vmem [#allocation8], %s1321
          %1323 = dma.done %s1319, 4096
        $region64: #{tpu_custom_call.1} parent=59 // pred_fallthru
          _
      $region60: #{tpu_custom_call.1} parent=5 // pred_fallthru
        _
    $region6: #{tpu_custom_call.1} parent=1 // loop_footer
      %s22 = sadd.s32 1, %s18
    $region7: #{tpu_custom_call.1} parent=1 // loop_footer_branch
      %17 = sbr.rel target = $region3
    $region8: #{tpu_custom_call.1} parent=1 // loop_exit
      _
    %1324 = vsyncpa [#allocation3], 1
    %s1325 = scalar_lea.sflag [#allocation3], 1
    %1326 = vsyncpa %s1325, 1
    %1327 = vsyncpa [#allocation6], 1
    %1328 = vsyncpa [#allocation4], 1
    %s1329 = scalar_lea.sflag [#allocation4], 1
    %1330 = vsyncpa %s1329, 1

</llo_original>
